<compile_context>
chip_gen: v6e
topology: v6e:2x2x1
jax: 0.10.0
libtpu: 0.0.40
codegen_flags: <defaults>
</compile_context>

<pallas_src>
import jax
import jax.numpy as jnp
from jax.experimental import pallas as pl
from jax.experimental.pallas import tpu as pltpu

_LANES = 128
_MASK_SUBLANES = 32  # int8 (32, 128) sublane tiling granularity


def _elementwise_kernel(x_ref, add_ref, sub_ref, mul_ref, div_ref, gt_ref, lt_ref):
    x = x_ref[...]
    add_ref[...] = x + 2.0
    sub_ref[...] = x - 2.0
    mul_ref[...] = x * 2.0
    div_ref[...] = x * 0.5            # exact: 0.5 is a power of two
    gt_ref[...] = (x > 1.0).astype(jnp.int8)
    lt_ref[...] = (x < 3.0).astype(jnp.int8)


def _max_tile_rows():
    """Largest row tile whose double-buffered footprint (2 * tile * 128 * 22 B)
    fits the default scoped-VMEM limit of the current TPU generation."""
    try:
        kind = jax.devices()[0].device_kind.lower()
    except Exception:
        kind = ""
    if "v6" in kind or "v7" in kind:
        return 4096   # ~22 MiB < 32 MiB default scoped VMEM (v6e/v7x)
    return 2048       # ~11 MiB < 16 MiB default scoped VMEM (v5e and older)


def _round_up(a, m):
    return ((a + m - 1) // m) * m


def pt_module_forward(x):
    """x: float array (e.g. NCHW). Returns the 6-tuple like PtModule.forward."""
    orig_shape = x.shape
    n = x.size
    max_tile = _max_tile_rows()

    rows = pl.cdiv(n, _LANES)

    # ---- tiling policy: avoid padding whenever possible ----
    if rows % _MASK_SUBLANES == 0:
        # Tile on 32-row granularity, no padding.  Aim for >= 2 grid steps
        # (dual-TensorCore sharding on v7x), capped by the VMEM budget.
        half = _round_up(max(rows // 2, 1), _MASK_SUBLANES)
        tile = min(max_tile, max(_MASK_SUBLANES, half))
    elif rows <= max_tile:
        # Single full-array block: block_shape == array dims is exempt from
        # the (32, 128) int8 tiling rule -> no padding, no un-pad slicing.
        tile = rows
    else:
        # Large ragged row count: pad rows to the int8 sublane granularity
        # (the only case that still needs any padding).
        rows = _round_up(rows, _MASK_SUBLANES)
        tile = max_tile

    padded_n = rows * _LANES
    x_flat = x.reshape(-1)
    if padded_n != n:
        x_flat = jnp.pad(x_flat, (0, padded_n - n))
    x2d = x_flat.reshape(rows, _LANES)

    fspec = jax.ShapeDtypeStruct((rows, _LANES), x.dtype)
    mspec = jax.ShapeDtypeStruct((rows, _LANES), jnp.int8)

    block = pl.BlockSpec((tile, _LANES), lambda i: (i, 0))
    grid = (pl.cdiv(rows, tile),)

    outs = pl.pallas_call(
        _elementwise_kernel,
        out_shape=(fspec, fspec, fspec, fspec, mspec, mspec),
        grid=grid,
        in_specs=[block],
        out_specs=(block, block, block, block, block, block),
        compiler_params=pltpu.CompilerParams(
            dimension_semantics=("parallel",),
        ),
        cost_estimate=pl.CostEstimate(
            flops=6 * padded_n,
            transcendentals=0,
            bytes_accessed=22 * padded_n,  # 4B in + 16B f32 out + 2B i8 out
        ),
    )(x2d)

    add_r, sub_r, mul_r, div_r, gt_r, lt_r = outs

    if padded_n == n:
        def _unpad(a):
            return a.reshape(orig_shape)          # free reshape, no slicing
    else:
        def _unpad(a):
            return a.reshape(-1)[:n].reshape(orig_shape)

    return (
        _unpad(add_r),
        _unpad(sub_r),
        _unpad(mul_r),
        _unpad(div_r),
        _unpad(gt_r).astype(jnp.bool_),
        _unpad(lt_r).astype(jnp.bool_),
    )


if __name__ == "__main__":
    key = jax.random.PRNGKey(0)
    # Small NCHW input: batch=2, channels=4, 16x16 spatial.
    x = jax.random.normal(key, (2, 4, 16, 16), dtype=jnp.float32) * 3.0

    outs = pt_module_forward(x)
    outs = jax.block_until_ready(outs)

    # Reference check (plain JAX)
    ref = (x + 2, x - 2, x * 2, x / 2, x > 1, x < 3)
    ok = True
    for got, exp in zip(outs, ref):
        assert got.shape == exp.shape and got.dtype == exp.dtype
        if got.dtype == jnp.bool_:
            ok &= bool(jnp.all(got == exp))
        else:
            ok &= bool(jnp.allclose(got, exp, atol=1e-6, rtol=1e-6))
    assert ok, "mismatch vs reference"
    print("KERNEL_OK")
</pallas_src>

<mosaic_0001>
module attributes {stable_mosaic.version = 11 : i64} {
  func.func @_elementwise_kernel(%arg0: i32, %arg1: memref<16x128xf32, #tpu.memory_space<vmem>>, %arg2: memref<16x128xf32, #tpu.memory_space<vmem>>, %arg3: memref<16x128xf32, #tpu.memory_space<vmem>>, %arg4: memref<16x128xf32, #tpu.memory_space<vmem>>, %arg5: memref<16x128xf32, #tpu.memory_space<vmem>>, %arg6: memref<16x128xi8, #tpu.memory_space<vmem>>, %arg7: memref<16x128xi8, #tpu.memory_space<vmem>>) attributes {dimension_semantics = [#tpu.dimension_semantics<parallel>], iteration_bounds = array<i64: 1>, scalar_prefetch = 0 : i64, scratch_operands = 0 : i64, tpu.core_type = #tpu.core_type<tc>, window_params = [{transform_indices = @transform_0, window_bounds = array<i64: 16, 128>}, {transform_indices = @transform_1, window_bounds = array<i64: 16, 128>}, {transform_indices = @transform_2, window_bounds = array<i64: 16, 128>}, {transform_indices = @transform_3, window_bounds = array<i64: 16, 128>}, {transform_indices = @transform_4, window_bounds = array<i64: 16, 128>}, {transform_indices = @transform_5, window_bounds = array<i64: 16, 128>}, {transform_indices = @transform_6, window_bounds = array<i64: 16, 128>}]} {
    %c0 = arith.constant 0 : index
    %c0_0 = arith.constant 0 : index
    %0 = vector.load %arg1[%c0, %c0_0] : memref<16x128xf32, #tpu.memory_space<vmem>>, vector<16x128xf32>
    %cst = arith.constant 2.000000e+00 : f32
    %1 = vector.broadcast %cst : f32 to vector<16x128xf32>
    %2 = arith.addf %0, %1 : vector<16x128xf32>
    %c0_1 = arith.constant 0 : index
    %c0_2 = arith.constant 0 : index
    %3 = vector.load %arg2[%c0_1, %c0_2] : memref<16x128xf32, #tpu.memory_space<vmem>>, vector<16x128xf32>
    tpu.vector_store %arg2[%c0_1, %c0_2], %2 {strides = array<i32>} : memref<16x128xf32, #tpu.memory_space<vmem>>, vector<16x128xf32>,
    %cst_3 = arith.constant 2.000000e+00 : f32
    %4 = vector.broadcast %cst_3 : f32 to vector<16x128xf32>
    %5 = arith.subf %0, %4 : vector<16x128xf32>
    %c0_4 = arith.constant 0 : index
    %c0_5 = arith.constant 0 : index
    %6 = vector.load %arg3[%c0_4, %c0_5] : memref<16x128xf32, #tpu.memory_space<vmem>>, vector<16x128xf32>
    tpu.vector_store %arg3[%c0_4, %c0_5], %5 {strides = array<i32>} : memref<16x128xf32, #tpu.memory_space<vmem>>, vector<16x128xf32>,
    %cst_6 = arith.constant 2.000000e+00 : f32
    %7 = vector.broadcast %cst_6 : f32 to vector<16x128xf32>
    %8 = arith.mulf %0, %7 : vector<16x128xf32>
    %c0_7 = arith.constant 0 : index
    %c0_8 = arith.constant 0 : index
    %9 = vector.load %arg4[%c0_7, %c0_8] : memref<16x128xf32, #tpu.memory_space<vmem>>, vector<16x128xf32>
    tpu.vector_store %arg4[%c0_7, %c0_8], %8 {strides = array<i32>} : memref<16x128xf32, #tpu.memory_space<vmem>>, vector<16x128xf32>,
    %cst_9 = arith.constant 5.000000e-01 : f32
    %10 = vector.broadcast %cst_9 : f32 to vector<16x128xf32>
    %11 = arith.mulf %0, %10 : vector<16x128xf32>
    %c0_10 = arith.constant 0 : index
    %c0_11 = arith.constant 0 : index
    %12 = vector.load %arg5[%c0_10, %c0_11] : memref<16x128xf32, #tpu.memory_space<vmem>>, vector<16x128xf32>
    tpu.vector_store %arg5[%c0_10, %c0_11], %11 {strides = array<i32>} : memref<16x128xf32, #tpu.memory_space<vmem>>, vector<16x128xf32>,
    %cst_12 = arith.constant 1.000000e+00 : f32
    %13 = vector.broadcast %cst_12 : f32 to vector<16x128xf32>
    %14 = arith.cmpf ogt, %0, %13 : vector<16x128xf32>
    %15 = arith.extui %14 : vector<16x128xi1> to vector<16x128xi8>
    %c0_13 = arith.constant 0 : index
    %c0_14 = arith.constant 0 : index
    %16 = vector.load %arg6[%c0_13, %c0_14] : memref<16x128xi8, #tpu.memory_space<vmem>>, vector<16x128xi8>
    tpu.vector_store %arg6[%c0_13, %c0_14], %15 {strides = array<i32>} : memref<16x128xi8, #tpu.memory_space<vmem>>, vector<16x128xi8>,
    %cst_15 = arith.constant 3.000000e+00 : f32
    %17 = vector.broadcast %cst_15 : f32 to vector<16x128xf32>
    %18 = arith.cmpf olt, %0, %17 : vector<16x128xf32>
    %19 = arith.extui %18 : vector<16x128xi1> to vector<16x128xi8>
    %c0_16 = arith.constant 0 : index
    %c0_17 = arith.constant 0 : index
    %20 = vector.load %arg7[%c0_16, %c0_17] : memref<16x128xi8, #tpu.memory_space<vmem>>, vector<16x128xi8>
    tpu.vector_store %arg7[%c0_16, %c0_17], %19 {strides = array<i32>} : memref<16x128xi8, #tpu.memory_space<vmem>>, vector<16x128xi8>,
    return
  }
  func.func @transform_0(%arg0: i32) -> (i32, i32) {
    %c0_i32 = arith.constant 0 : i32
    %c0_i32_0 = arith.constant 0 : i32
    return %arg0, %c0_i32 : i32, i32
  }
  func.func @transform_1(%arg0: i32) -> (i32, i32) {
    %c0_i32 = arith.constant 0 : i32
    %c0_i32_0 = arith.constant 0 : i32
    return %arg0, %c0_i32 : i32, i32
  }
  func.func @transform_2(%arg0: i32) -> (i32, i32) {
    %c0_i32 = arith.constant 0 : i32
    %c0_i32_0 = arith.constant 0 : i32
    return %arg0, %c0_i32 : i32, i32
  }
  func.func @transform_3(%arg0: i32) -> (i32, i32) {
    %c0_i32 = arith.constant 0 : i32
    %c0_i32_0 = arith.constant 0 : i32
    return %arg0, %c0_i32 : i32, i32
  }
  func.func @transform_4(%arg0: i32) -> (i32, i32) {
    %c0_i32 = arith.constant 0 : i32
    %c0_i32_0 = arith.constant 0 : i32
    return %arg0, %c0_i32 : i32, i32
  }
  func.func @transform_5(%arg0: i32) -> (i32, i32) {
    %c0_i32 = arith.constant 0 : i32
    %c0_i32_0 = arith.constant 0 : i32
    return %arg0, %c0_i32 : i32, i32
  }
  func.func @transform_6(%arg0: i32) -> (i32, i32) {
    %c0_i32 = arith.constant 0 : i32
    %c0_i32_0 = arith.constant 0 : i32
    return %arg0, %c0_i32 : i32, i32
  }
}

</mosaic_0001>

<llo_original>
// kernel: tpu_custom_call.1
$region0: #{tpu_custom_call.1}
  #allocation0 [shape = 'u32[]', space=smem, size = 0x4, offset = 0x4, fixed_abs, tag = 'smem constant byte address 0x4 - core index']
  #allocation1 [shape = 'u32[144,128]{1,0:T(1,128)}', space=vmem, size = 0x12000, scoped, tag = 'internal scratch']
  %s0 = inlined_call_operand.hbm [shape: f32[16,128], index: 0, kind: input, shape index: {}]
  %s1 = inlined_call_operand.hbm [shape: f32[16,128], index: 1, kind: output, shape index: {0}]
  %s2 = inlined_call_operand.hbm [shape: f32[16,128], index: 2, kind: output, shape index: {1}]
  %s3 = inlined_call_operand.hbm [shape: f32[16,128], index: 3, kind: output, shape index: {2}]
  %s4 = inlined_call_operand.hbm [shape: f32[16,128], index: 4, kind: output, shape index: {3}]
  %s5 = inlined_call_operand.hbm [shape: s8[16,128], index: 5, kind: output, shape index: {4}]
  %s6 = inlined_call_operand.hbm [shape: s8[16,128], index: 6, kind: output, shape index: {5}]
  %7 = xla_tuple %s1, %s2, %s3, %s4, %s5, %s6
  %s8 = sld [smem:[#allocation0]]
  $region58: #{tpu_custom_call.1} parent=0
    _
  %s10 = ssub.s32 1, %s8
  %s11 = scalar_select 0, %s10, %s8
  $region1: #{tpu_custom_call.1} parent=0
    #allocation2 [shape = 'u8[8192]{0}', space=vmem, size = 0x2000, scoped, tag = 'input window, operand 0, single buffered']
    #allocation3 [shape = 's32[1]{0}', space=sflag, size = 0x4, scoped, tag = 'scoped memory for tpu_custom_call.1']
    #allocation4 [shape = 's32[1]{0}', space=sflag, size = 0x4, scoped, tag = 'scoped memory for tpu_custom_call.1']
    #allocation5 [shape = 'u8[8192]{0}', space=vmem, size = 0x2000, scoped, tag = 'output window, operand 0, single buffered']
    #allocation6 [shape = 'u8[8192]{0}', space=vmem, size = 0x2000, scoped, tag = 'output window, operand 1, single buffered']
    #allocation7 [shape = 's32[1]{0}', space=sflag, size = 0x4, scoped, tag = 'scoped memory for tpu_custom_call.1']
    #allocation8 [shape = 'u8[8192]{0}', space=vmem, size = 0x2000, scoped, tag = 'output window, operand 2, single buffered']
    #allocation9 [shape = 'u8[8192]{0}', space=vmem, size = 0x2000, scoped, tag = 'output window, operand 3, single buffered']
    #allocation10 [shape = 's32[1]{0}', space=sflag, size = 0x4, scoped, tag = 'scoped memory for tpu_custom_call.1']
    #allocation11 [shape = 'u8[2048]{0}', space=vmem, size = 0x800, scoped, tag = 'output window, operand 4, single buffered']
    #allocation12 [shape = 'u8[2048]{0}', space=vmem, size = 0x800, scoped, tag = 'output window, operand 5, single buffered']
    #allocation13 [shape = 's32[1]{0}', space=sflag, size = 0x4, scoped, tag = 'scoped memory for tpu_custom_call.1']
    %12 = vsyncpa [#allocation3], 0
    %13 = vsyncpa [#allocation4], 0
    %14 = vsyncpa [#allocation7], 0
    %15 = vsyncpa [#allocation10], 0
    %16 = vsyncpa [#allocation13], 0
    // Predicated region
    $region2: #{tpu_custom_call.1} parent=1 // pred_check
      _
    $region3: #{tpu_custom_call.1} parent=1 // pred_check_branch
      %18 = sbr.rel (0) target = $region5
    $region4: #{tpu_custom_call.1} parent=1 // pred_region
      %s20 = ssub.s32 256, 256
      %21 = vsyncadd [#allocation3], %s20
      %s22 = sshll.u32 [#allocation2], 4
      %s23 = int_to_ptr.vmem [resolvable:$true] %s22
      %28 = dma.hbm_to_vmem [thread:$0]  %s0, 256, %s23, [#allocation3], 128, 128, 8
    $region5: #{tpu_custom_call.1} parent=1 // pred_fallthru
      _
    // Predicated region
    $region6: #{tpu_custom_call.1} parent=1 // pred_check
      _
    $region7: #{tpu_custom_call.1} parent=1 // pred_check_branch
      %30 = sbr.rel (0) target = $region9
    $region8: #{tpu_custom_call.1} parent=1 // pred_region
      %31 = dma.done [#allocation3], 256
    $region9: #{tpu_custom_call.1} parent=1 // pred_fallthru
      _
    %v34 = vld [vmem:[#allocation2] sm:$0xff]
    %v35 = vld [vmem:[#allocation2 + $0x8] sm:$0xff]
    %v36 = vadd.f32 %v34, 2.0
    %v37 = vadd.f32 %v35, 2.0
    %38 = vst [vmem:[#allocation5] sm:$0xff] %v36
    %39 = vst [vmem:[#allocation5 + $0x8] sm:$0xff] %v37
    %v40 = vsub.f32 %v34, 2.0
    %v41 = vsub.f32 %v35, 2.0
    %42 = vst [vmem:[#allocation6] sm:$0xff] %v40
    %43 = vst [vmem:[#allocation6 + $0x8] sm:$0xff] %v41
    %v44 = vmul.f32 %v34, 2.0
    %v45 = vmul.f32 %v35, 2.0
    %46 = vst [vmem:[#allocation8] sm:$0xff] %v44
    %47 = vst [vmem:[#allocation8 + $0x8] sm:$0xff] %v45
    %v48 = vmul.f32 %v34, 0.5
    %v49 = vmul.f32 %v35, 0.5
    %50 = vst [vmem:[#allocation9] sm:$0xff] %v48
    %51 = vst [vmem:[#allocation9 + $0x8] sm:$0xff] %v49
    %vm52 = vcmp.gt.f32.partialorder %v34, 1.0
    %vm53 = vcmp.gt.f32.partialorder %v35, 1.0
    %vm54 = vmpackc.low %vm53, %vm52
    %vm55 = vmpackc.even %vm54, %vm54
    %v56 = vsel %vm55, 16843009, 0
    %v57 = vunpack.c.0.s8 %v56
    %v58 = vunpack.c.1.s8 %v56
    %v59 = vpack.c.b16 %v57, %v57
    %v60 = vpack.c.b8 %v59, %v59
    %v61 = vpack.c.b16 %v58, %v58
    %v62 = vpack.c.b8 %v61, %v61
    %63 = vst [vmem:[#allocation11] sm:$0x3] %v60
    %64 = vst [vmem:[#allocation11 + $0x2] sm:$0x3] %v62
    %vm65 = vcmp.lt.f32.partialorder %v34, 3.0
    %vm66 = vcmp.lt.f32.partialorder %v35, 3.0
    %vm67 = vmpackc.low %vm66, %vm65
    %vm68 = vmpackc.even %vm67, %vm67
    %v69 = vsel %vm68, 16843009, 0
    %v70 = vunpack.c.0.s8 %v69
    %v71 = vunpack.c.1.s8 %v69
    %v72 = vpack.c.b16 %v70, %v70
    %v73 = vpack.c.b8 %v72, %v72
    %v74 = vpack.c.b16 %v71, %v71
    %v75 = vpack.c.b8 %v74, %v74
    %76 = vst [vmem:[#allocation12] sm:$0x3] %v73
    %77 = vst [vmem:[#allocation12 + $0x2] sm:$0x3] %v75
    // Predicated region
    $region10: #{tpu_custom_call.1} parent=1 // pred_check
      _
    $region11: #{tpu_custom_call.1} parent=1 // pred_check_branch
      %79 = sbr.rel (0) target = $region13
    $region12: #{tpu_custom_call.1} parent=1 // pred_region
      %s81 = ssub.s32 256, 256
      %82 = vsyncadd [#allocation4], %s81
      %s83 = sshll.u32 [#allocation5], 4
      %s84 = int_to_ptr.vmem [resolvable:$true] %s83
      %89 = dma.vmem_to_hbm [thread:$0]  %s84, 256, %s1, [#allocation4], 128, 128, 8
    $region13: #{tpu_custom_call.1} parent=1 // pred_fallthru
      _
    // Predicated region
    $region14: #{tpu_custom_call.1} parent=1 // pred_check
      _
    $region15: #{tpu_custom_call.1} parent=1 // pred_check_branch
      %91 = sbr.rel (0) target = $region17
    $region16: #{tpu_custom_call.1} parent=1 // pred_region
      %s93 = ssub.s32 256, 256
      %94 = vsyncadd [#allocation7], %s93
      %s95 = sshll.u32 [#allocation6], 4
      %s96 = int_to_ptr.vmem [resolvable:$true] %s95
      %101 = dma.vmem_to_hbm [thread:$0]  %s96, 256, %s2, [#allocation7], 128, 128, 8
    $region17: #{tpu_custom_call.1} parent=1 // pred_fallthru
      _
    // Predicated region
    $region18: #{tpu_custom_call.1} parent=1 // pred_check
      _
    $region19: #{tpu_custom_call.1} parent=1 // pred_check_branch
      %103 = sbr.rel (0) target = $region21
    $region20: #{tpu_custom_call.1} parent=1 // pred_region
      %s105 = ssub.s32 256, 256
      %106 = vsyncadd [#allocation7], %s105
      %s107 = sshll.u32 [#allocation8], 4
      %s108 = int_to_ptr.vmem [resolvable:$true] %s107
      %113 = dma.vmem_to_hbm [thread:$0]  %s108, 256, %s3, [#allocation7], 128, 128, 8
    $region21: #{tpu_custom_call.1} parent=1 // pred_fallthru
      _
    // Predicated region
    $region22: #{tpu_custom_call.1} parent=1 // pred_check
      _
    $region23: #{tpu_custom_call.1} parent=1 // pred_check_branch
      %115 = sbr.rel (0) target = $region25
    $region24: #{tpu_custom_call.1} parent=1 // pred_region
      %s117 = ssub.s32 256, 256
      %118 = vsyncadd [#allocation10], %s117
      %s119 = sshll.u32 [#allocation9], 4
      %s120 = int_to_ptr.vmem [resolvable:$true] %s119
      %125 = dma.vmem_to_hbm [thread:$0]  %s120, 256, %s4, [#allocation10], 128, 128, 8
    $region25: #{tpu_custom_call.1} parent=1 // pred_fallthru
      _
    // Predicated region
    $region26: #{tpu_custom_call.1} parent=1 // pred_check
      _
    $region27: #{tpu_custom_call.1} parent=1 // pred_check_branch
      %127 = sbr.rel (0) target = $region29
    $region28: #{tpu_custom_call.1} parent=1 // pred_region
      %s129 = ssub.s32 64, 64
      %130 = vsyncadd [#allocation10], %s129
      %s131 = sshll.u32 [#allocation11], 4
      %s132 = int_to_ptr.vmem [resolvable:$true] %s131
      %137 = dma.vmem_to_hbm [thread:$0]  %s132, 64, %s5, [#allocation10], 32, 32, 2
    $region29: #{tpu_custom_call.1} parent=1 // pred_fallthru
      _
    // Predicated region
    $region30: #{tpu_custom_call.1} parent=1 // pred_check
      _
    $region31: #{tpu_custom_call.1} parent=1 // pred_check_branch
      %139 = sbr.rel (0) target = $region33
    $region32: #{tpu_custom_call.1} parent=1 // pred_region
      %s141 = ssub.s32 64, 64
      %142 = vsyncadd [#allocation13], %s141
      %s143 = sshll.u32 [#allocation12], 4
      %s144 = int_to_ptr.vmem [resolvable:$true] %s143
      %149 = dma.vmem_to_hbm [thread:$0]  %s144, 64, %s6, [#allocation13], 32, 32, 2
    $region33: #{tpu_custom_call.1} parent=1 // pred_fallthru
      _
    // Predicated region
    $region34: #{tpu_custom_call.1} parent=1 // pred_check
      _
    $region35: #{tpu_custom_call.1} parent=1 // pred_check_branch
      %151 = sbr.rel (0) target = $region37
    $region36: #{tpu_custom_call.1} parent=1 // pred_region
      %152 = dma.done [#allocation4], 256
    $region37: #{tpu_custom_call.1} parent=1 // pred_fallthru
      _
    // Predicated region
    $region38: #{tpu_custom_call.1} parent=1 // pred_check
      _
    $region39: #{tpu_custom_call.1} parent=1 // pred_check_branch
      %154 = sbr.rel (0) target = $region41
    $region40: #{tpu_custom_call.1} parent=1 // pred_region
      %155 = dma.done [#allocation7], 256
    $region41: #{tpu_custom_call.1} parent=1 // pred_fallthru
      _
    // Predicated region
    $region42: #{tpu_custom_call.1} parent=1 // pred_check
      _
    $region43: #{tpu_custom_call.1} parent=1 // pred_check_branch
      %157 = sbr.rel (0) target = $region45
    $region44: #{tpu_custom_call.1} parent=1 // pred_region
      %158 = dma.done [#allocation7], 256
    $region45: #{tpu_custom_call.1} parent=1 // pred_fallthru
      _
    // Predicated region
    $region46: #{tpu_custom_call.1} parent=1 // pred_check
      _
    $region47: #{tpu_custom_call.1} parent=1 // pred_check_branch
      %160 = sbr.rel (0) target = $region49
    $region48: #{tpu_custom_call.1} parent=1 // pred_region
      %161 = dma.done [#allocation10], 256
    $region49: #{tpu_custom_call.1} parent=1 // pred_fallthru
      _
    // Predicated region
    $region50: #{tpu_custom_call.1} parent=1 // pred_check
      _
    $region51: #{tpu_custom_call.1} parent=1 // pred_check_branch
      %163 = sbr.rel (0) target = $region53
    $region52: #{tpu_custom_call.1} parent=1 // pred_region
      %164 = dma.done [#allocation10], 64
    $region53: #{tpu_custom_call.1} parent=1 // pred_fallthru
      _
    // Predicated region
    $region54: #{tpu_custom_call.1} parent=1 // pred_check
      _
    $region55: #{tpu_custom_call.1} parent=1 // pred_check_branch
      %166 = sbr.rel (0) target = $region57
    $region56: #{tpu_custom_call.1} parent=1 // pred_region
      %167 = dma.done [#allocation13], 64
    $region57: #{tpu_custom_call.1} parent=1 // pred_fallthru
      _
    %168 = vsyncpa [#allocation3], 1
    %169 = vsyncpa [#allocation4], 1
    %170 = vsyncpa [#allocation7], 1
    %171 = vsyncpa [#allocation10], 1
    %172 = vsyncpa [#allocation13], 1

</llo_original>
